<compile_context>
chip_gen: v7x
topology: tpu7x:2x2x1
jax: 0.10.0
libtpu: 0.0.40
codegen_flags: <defaults>
</compile_context>

<pallas_src>
import functools

import jax
import jax.numpy as jnp
from jax import lax
from jax.experimental import pallas as pl
from jax.experimental.pallas import tpu as pltpu


def _forward_ll_kernel(x_ref, y_ref, out_ref, *, scale, reduce_axis, use_bf16_matmul):
    """One batch tile: accumulate (Y - mu)^T (Y - mu) into the resident out block."""
    i = pl.program_id(reduce_axis)

    @pl.when(i == 0)
    def _():
        out_ref[...] = jnp.zeros_like(out_ref)

    # mu = forward(X); abstract in the reference module -> identity predictor.
    x = x_ref[...].astype(jnp.float32)
    y = y_ref[...].astype(jnp.float32)
    r = y - x  # [tm, D] residual, f32 on the VPU.

    # bf16 MXU operands (single-pass vmatmul) with f32 accumulation: ~3-6x
    # fewer MXU pushes than f32xf32 multi-pass. Accumulation stays f32.
    r_mxu = r.astype(jnp.bfloat16) if use_bf16_matmul else r

    # Contract the batch (sublane) dim of r with itself: r^T @ r on the MXU
    # without materializing an explicit XLU transpose.
    out_ref[...] += lax.dot_general(
        r_mxu, r_mxu,
        dimension_numbers=(((0,), (0,)), ((), ())),
        preferred_element_type=jnp.float32,
    )

    @pl.when(i == pl.num_programs(reduce_axis) - 1)
    def _():
        out_ref[...] = out_ref[...] * scale


def _pick_batch_tile(n_per, tm):
    """Largest legal tile <= tm that divides n_per (multiple of 8, or full dim)."""
    tm = min(tm, n_per)
    if n_per % tm == 0:
        return tm
    cand = (tm // 8) * 8
    while cand >= 8:
        if n_per % cand == 0:
            return cand
        cand -= 8
    return n_per  # full per-partial batch (legal when it equals the array dim)


def bnn_regress_forward_ll(x, y, *, precision=2.0, tm=4096, num_partials=1,
                           use_bf16_matmul=True, core_parallel=False):
    """-0.5 * precision * sum_n dyad(y_n - mu_n, y_n - mu_n)  ->  [D, D] f32.

    num_partials > 1 (with core_parallel=True) shards the batch across v7x's
    two TensorCores; keep it at 1 on single-TC chips (v5e / v6e) where the
    extra resident block + combine is pure overhead.
    """
    assert x.shape == y.shape and x.ndim == 2
    n, d = x.shape
    assert n % num_partials == 0, "batch must be divisible by num_partials"
    n_per = n // num_partials
    if num_partials > 1:
        assert n_per % 8 == 0, "per-partial batch must be a multiple of 8"
    tm = _pick_batch_tile(n_per, tm)
    tiles_per_partial = n_per // tm

    scale = -0.5 * float(precision)

    # Generous VMEM budget: 2 inputs x 2 pipeline buffers x (tm, D) tiles, the
    # in-kernel f32/bf16 residual temporaries, the resident D^2 accumulator and
    # Mosaic internal scratch headroom. Tiny at these shapes on every chip.
    in_bytes = jnp.dtype(x.dtype).itemsize
    working = 2 * 2 * tm * d * in_bytes + 3 * tm * d * 4 + 2 * d * d * 4
    vmem_limit = int(min(max(32 << 20, 2 * working), 48 << 20))

    if num_partials == 1:
        reduce_axis = 0
        grid = (tiles_per_partial,)
        in_specs = [
            pl.BlockSpec((tm, d), lambda i: (i, 0)),   # X (mu) tile
            pl.BlockSpec((tm, d), lambda i: (i, 0)),   # Y tile
        ]
        out_specs = pl.BlockSpec((d, d), lambda i: (0, 0))     # resident accumulator
        out_shape = jax.ShapeDtypeStruct((d, d), jnp.float32)
        dim_sem = ("arbitrary",)
    else:
        reduce_axis = 1
        grid = (num_partials, tiles_per_partial)

        def in_map(c, i):
            return (c * tiles_per_partial + i, 0)

        in_specs = [
            pl.BlockSpec((tm, d), in_map),   # X (mu) tile
            pl.BlockSpec((tm, d), in_map),   # Y tile
        ]
        # Leading dim squeezed: kernel sees a resident (D, D) f32 accumulator.
        out_specs = pl.BlockSpec((None, d, d), lambda c, i: (c, 0, 0))
        out_shape = jax.ShapeDtypeStruct((num_partials, d, d), jnp.float32)
        # On v7x, CORE_PARALLEL is required to actually shard the partial axis
        # across both TensorCores; plain "parallel" may remain a serial loop.
        first = pltpu.CORE_PARALLEL if core_parallel else "parallel"
        dim_sem = (first, "arbitrary")

    kernel = functools.partial(
        _forward_ll_kernel, scale=scale, reduce_axis=reduce_axis,
        use_bf16_matmul=use_bf16_matmul)

    out = pl.pallas_call(
        kernel,
        out_shape=out_shape,
        grid_spec=pltpu.PrefetchScalarGridSpec(
            num_scalar_prefetch=0,
            grid=grid,
            in_specs=in_specs,
            out_specs=out_specs,
        ),
        compiler_params=pltpu.CompilerParams(
            dimension_semantics=dim_sem,
            vmem_limit_bytes=vmem_limit,
        ),
    )(x, y)

    if num_partials == 1:
        return out
    # Tiny [num_partials, D, D] -> [D, D] combine (scale already applied in-kernel).
    return jnp.sum(out, axis=0)


def bnn_regress_forward_ll_ref(x, y, precision=2.0):
    r = (y - x).astype(jnp.float32)
    return -0.5 * precision * (r.T @ r)


if __name__ == "__main__":
    key = jax.random.PRNGKey(0)
    kx, ky = jax.random.split(key)

    # Modest shapes: N = 1024 batch rows, D = 128 features (one vreg lane width).
    N, D = 1024, 128
    precision = 2.0  # default from BNNRegress.__init__

    x = jax.random.normal(kx, (N, D), dtype=jnp.float32)   # "mu" (identity forward)
    y = jax.random.normal(ky, (N, D), dtype=jnp.float32)   # regression targets

    ref = bnn_regress_forward_ll_ref(x, y, precision=precision)

    # Fast path: bf16 MXU operands, f32 accumulation (loosened tolerance).
    out = bnn_regress_forward_ll(x, y, precision=precision, use_bf16_matmul=True)
    out = jax.block_until_ready(out)
    assert out.shape == (D, D) and out.dtype == jnp.float32
    assert jnp.allclose(out, ref, rtol=2e-2, atol=4.0), "bf16-MXU path mismatch"

    # Full-f32 MXU path: tight validation against the JAX reference.
    out_f32 = bnn_regress_forward_ll(x, y, precision=precision, use_bf16_matmul=False)
    out_f32 = jax.block_until_ready(out_f32)
    assert jnp.allclose(out_f32, ref, rtol=1e-5, atol=1e-3), "f32 path mismatch"

    print("KERNEL_OK")
</pallas_src>

<mosaic_0001>
module attributes {stable_mosaic.version = 11 : i64} {
  func.func @_forward_ll_kernel(%arg0: i32, %arg1: memref<1024x128xf32, #tpu.memory_space<vmem>>, %arg2: memref<1024x128xf32, #tpu.memory_space<vmem>>, %arg3: memref<128x128xf32, #tpu.memory_space<vmem>>) attributes {dimension_semantics = [#tpu.dimension_semantics<arbitrary>], iteration_bounds = array<i64: 1>, scalar_prefetch = 0 : i64, scratch_operands = 0 : i64, tpu.core_type = #tpu.core_type<tc>, window_params = [{transform_indices = @transform_0, window_bounds = array<i64: 1024, 128>}, {transform_indices = @transform_1, window_bounds = array<i64: 1024, 128>}, {pipeline_mode = #tpu.pipeline_mode<synchronous>, transform_indices = @transform_2, window_bounds = array<i64: 128, 128>}]} {
    %c0_i32 = arith.constant 0 : i32
    %0 = arith.cmpi eq, %arg0, %c0_i32 : i32
    %1 = arith.extui %0 : i1 to i32
    %c0_i32_0 = arith.constant 0 : i32
    %2 = arith.cmpi ne, %1, %c0_i32_0 : i32
    scf.if %2 {
      %cst_10 = arith.constant 0.000000e+00 : f32
      %14 = vector.broadcast %cst_10 : f32 to vector<128x128xf32>
      %c0_11 = arith.constant 0 : index
      %c0_12 = arith.constant 0 : index
      %15 = vector.load %arg3[%c0_11, %c0_12] : memref<128x128xf32, #tpu.memory_space<vmem>>, vector<128x128xf32>
      tpu.vector_store %arg3[%c0_11, %c0_12], %14 {strides = array<i32>} : memref<128x128xf32, #tpu.memory_space<vmem>>, vector<128x128xf32>,
    } else {
    }
    %c0 = arith.constant 0 : index
    %c0_1 = arith.constant 0 : index
    %3 = vector.load %arg1[%c0, %c0_1] : memref<1024x128xf32, #tpu.memory_space<vmem>>, vector<1024x128xf32>
    %c0_2 = arith.constant 0 : index
    %c0_3 = arith.constant 0 : index
    %4 = vector.load %arg2[%c0_2, %c0_3] : memref<1024x128xf32, #tpu.memory_space<vmem>>, vector<1024x128xf32>
    %5 = arith.subf %4, %3 : vector<1024x128xf32>
    %6 = arith.truncf %5 : vector<1024x128xf32> to vector<1024x128xbf16>
    %c0_4 = arith.constant 0 : index
    %c0_5 = arith.constant 0 : index
    %7 = vector.load %arg3[%c0_4, %c0_5] : memref<128x128xf32, #tpu.memory_space<vmem>>, vector<128x128xf32>
    %cst = arith.constant dense<0.000000e+00> : vector<128x128xf32>
    %8 = tpu.matmul %6, %6, %cst {dimension_numbers = #tpu.dot_dimension_numbers<[0], [0], [1], [1], [0, 1, 1, 1], [], []>} : vector<1024x128xbf16>, vector<1024x128xbf16>, vector<128x128xf32> -> vector<128x128xf32>
    %9 = arith.addf %7, %8 : vector<128x128xf32>
    %c0_6 = arith.constant 0 : index
    %c0_7 = arith.constant 0 : index
    %10 = vector.load %arg3[%c0_6, %c0_7] : memref<128x128xf32, #tpu.memory_space<vmem>>, vector<128x128xf32>
    tpu.vector_store %arg3[%c0_6, %c0_7], %9 {strides = array<i32>} : memref<128x128xf32, #tpu.memory_space<vmem>>, vector<128x128xf32>,
    %c0_i32_8 = arith.constant 0 : i32
    %11 = arith.cmpi eq, %arg0, %c0_i32_8 : i32
    %12 = arith.extui %11 : i1 to i32
    %c0_i32_9 = arith.constant 0 : i32
    %13 = arith.cmpi ne, %12, %c0_i32_9 : i32
    scf.if %13 {
      %c0_10 = arith.constant 0 : index
      %c0_11 = arith.constant 0 : index
      %14 = vector.load %arg3[%c0_10, %c0_11] : memref<128x128xf32, #tpu.memory_space<vmem>>, vector<128x128xf32>
      %cst_12 = arith.constant -1.000000e+00 : f32
      %15 = vector.broadcast %cst_12 : f32 to vector<128x128xf32>
      %16 = arith.mulf %14, %15 : vector<128x128xf32>
      %c0_13 = arith.constant 0 : index
      %c0_14 = arith.constant 0 : index
      %17 = vector.load %arg3[%c0_13, %c0_14] : memref<128x128xf32, #tpu.memory_space<vmem>>, vector<128x128xf32>
      tpu.vector_store %arg3[%c0_13, %c0_14], %16 {strides = array<i32>} : memref<128x128xf32, #tpu.memory_space<vmem>>, vector<128x128xf32>,
    } else {
    }
    return
  }
  func.func @transform_0(%arg0: i32) -> (i32, i32) {
    %c0_i32 = arith.constant 0 : i32
    %c0_i32_0 = arith.constant 0 : i32
    return %arg0, %c0_i32 : i32, i32
  }
  func.func @transform_1(%arg0: i32) -> (i32, i32) {
    %c0_i32 = arith.constant 0 : i32
    %c0_i32_0 = arith.constant 0 : i32
    return %arg0, %c0_i32 : i32, i32
  }
  func.func @transform_2(%arg0: i32) -> (i32, i32) {
    %c0_i32 = arith.constant 0 : i32
    %c0_i32_0 = arith.constant 0 : i32
    %c0_i32_1 = arith.constant 0 : i32
    return %c0_i32, %c0_i32_0 : i32, i32
  }
}

</mosaic_0001>

<llo_original>
// kernel: tpu_custom_call.1
$region0: #{tpu_custom_call.1}
  #allocation0 [shape = 'u32[]', space=smem, size = 0x4, offset = 0x4, fixed_abs, tag = 'smem constant byte address 0x4 - core index']
  #allocation1 [shape = 'u32[144,128]{1,0:T(1,128)}', space=vmem, size = 0x12000, scoped, tag = 'internal scratch']
  %s0 = inlined_call_operand.hbm [shape: f32[1024,128], index: 0, kind: input, shape index: {}]
  %s1 = inlined_call_operand.hbm [shape: f32[1024,128], index: 1, kind: input, shape index: {}]
  %s2 = inlined_call_operand.hbm [shape: f32[128,128], index: 2, kind: output, shape index: {}]
  %s3 = sld [smem:[#allocation0]]
  $region34: #{tpu_custom_call.1} parent=0
    _
  %s5 = ssub.s32 1, %s3
  %s6 = scalar_select 0, %s5, %s3
  $region1: #{tpu_custom_call.1} parent=0
    #allocation2 [shape = 'u8[524288]{0}', space=vmem, size = 0x80000, scoped, tag = 'input window, operand 0, single buffered']
    #allocation3 [shape = 's32[1]{0}', space=sflag, size = 0x4, scoped, tag = 'scoped memory for tpu_custom_call.1']
    #allocation4 [shape = 's32[1]{0}', space=sflag, size = 0x4, scoped, tag = 'scoped memory for tpu_custom_call.1']
    #allocation5 [shape = 'u8[524288]{0}', space=vmem, size = 0x80000, scoped, tag = 'input window, operand 1, single buffered']
    #allocation6 [shape = 's32[1]{0}', space=sflag, size = 0x4, scoped, tag = 'scoped memory for tpu_custom_call.1']
    #allocation7 [shape = 'u8[65536]{0}', space=vmem, size = 0x10000, scoped, tag = 'output window, operand 0, single buffered']
    %7 = vsyncpa [#allocation3], 0
    %8 = vsyncpa [#allocation6], 0
    %9 = vsyncpa [#allocation4], 0
    // Predicated region
    $region2: #{tpu_custom_call.1} parent=1 // pred_check
      _
    $region3: #{tpu_custom_call.1} parent=1 // pred_check_branch
      %11 = sbr.rel (0) target = $region5
    $region4: #{tpu_custom_call.1} parent=1 // pred_region
      %s13 = ssub.s32 16384, 16384
      %14 = vsyncadd [#allocation3], %s13
      %s15 = sshll.u32 [#allocation2], 4
      %s16 = int_to_ptr.vmem [resolvable:$true] %s15
      %21 = dma.hbm_to_vmem [thread:$0]  %s0, 16384, %s16, [#allocation3], 128, 128, 8
    $region5: #{tpu_custom_call.1} parent=1 // pred_fallthru
      _
    // Predicated region
    $region6: #{tpu_custom_call.1} parent=1 // pred_check
      _
    $region7: #{tpu_custom_call.1} parent=1 // pred_check_branch
      %23 = sbr.rel (0) target = $region9
    $region8: #{tpu_custom_call.1} parent=1 // pred_region
      %s25 = ssub.s32 16384, 16384
      %26 = vsyncadd [#allocation6], %s25
      %s27 = sshll.u32 [#allocation5], 4
      %s28 = int_to_ptr.vmem [resolvable:$true] %s27
      %33 = dma.hbm_to_vmem [thread:$0]  %s1, 16384, %s28, [#allocation6], 128, 128, 8
    $region9: #{tpu_custom_call.1} parent=1 // pred_fallthru
      _
    // Predicated region
    $region10: #{tpu_custom_call.1} parent=1 // pred_check
      _
    $region11: #{tpu_custom_call.1} parent=1 // pred_check_branch
      %35 = sbr.rel (0) target = $region13
    $region12: #{tpu_custom_call.1} parent=1 // pred_region
      %36 = dma.done [#allocation3], 16384
    $region13: #{tpu_custom_call.1} parent=1 // pred_fallthru
      _
    // Predicated region
    $region14: #{tpu_custom_call.1} parent=1 // pred_check
      _
    $region15: #{tpu_custom_call.1} parent=1 // pred_check_branch
      %38 = sbr.rel (0) target = $region17
    $region16: #{tpu_custom_call.1} parent=1 // pred_region
      %39 = dma.done [#allocation6], 16384
    $region17: #{tpu_custom_call.1} parent=1 // pred_fallthru
      _
    %p41 = scmp.eq.s32.totalorder 0, 0
    // Predicated region
    $region18: #{tpu_custom_call.1} parent=1 // pred_check
      %p42 = pneg %p41
    $region19: #{tpu_custom_call.1} parent=1 // pred_check_branch
      %44 = sbr.rel (%p42) target = $region21
    $region20: #{tpu_custom_call.1} parent=1 // pred_region
      %45 = vst [vmem:[#allocation7] sm:$0xff] 0.0
      %46 = vst [vmem:[#allocation7 + $0x8] sm:$0xff] 0.0
      %47 = vst [vmem:[#allocation7 + $0x10] sm:$0xff] 0.0
      %48 = vst [vmem:[#allocation7 + $0x18] sm:$0xff] 0.0
      %49 = vst [vmem:[#allocation7 + $0x20] sm:$0xff] 0.0
      %50 = vst [vmem:[#allocation7 + $0x28] sm:$0xff] 0.0
      %51 = vst [vmem:[#allocation7 + $0x30] sm:$0xff] 0.0
      %52 = vst [vmem:[#allocation7 + $0x38] sm:$0xff] 0.0
      %53 = vst [vmem:[#allocation7 + $0x40] sm:$0xff] 0.0
      %54 = vst [vmem:[#allocation7 + $0x48] sm:$0xff] 0.0
      %55 = vst [vmem:[#allocation7 + $0x50] sm:$0xff] 0.0
      %56 = vst [vmem:[#allocation7 + $0x58] sm:$0xff] 0.0
      %57 = vst [vmem:[#allocation7 + $0x60] sm:$0xff] 0.0
      %58 = vst [vmem:[#allocation7 + $0x68] sm:$0xff] 0.0
      %59 = vst [vmem:[#allocation7 + $0x70] sm:$0xff] 0.0
      %60 = vst [vmem:[#allocation7 + $0x78] sm:$0xff] 0.0
    $region21: #{tpu_custom_call.1} parent=1 // pred_fallthru
      _
    %v61 = vld [vmem:[#allocation2] sm:$0xff]
    %v62 = vld [vmem:[#allocation2 + $0x8] sm:$0xff]
    %v63 = vld [vmem:[#allocation2 + $0x10] sm:$0xff]
    %v64 = vld [vmem:[#allocation2 + $0x18] sm:$0xff]
    %v65 = vld [vmem:[#allocation2 + $0x20] sm:$0xff]
    %v66 = vld [vmem:[#allocation2 + $0x28] sm:$0xff]
    %v67 = vld [vmem:[#allocation2 + $0x30] sm:$0xff]
    %v68 = vld [vmem:[#allocation2 + $0x38] sm:$0xff]
    %v69 = vld [vmem:[#allocation2 + $0x40] sm:$0xff]
    %v70 = vld [vmem:[#allocation2 + $0x48] sm:$0xff]
    %v71 = vld [vmem:[#allocation2 + $0x50] sm:$0xff]
    %v72 = vld [vmem:[#allocation2 + $0x58] sm:$0xff]
    %v73 = vld [vmem:[#allocation2 + $0x60] sm:$0xff]
    %v74 = vld [vmem:[#allocation2 + $0x68] sm:$0xff]
    %v75 = vld [vmem:[#allocation2 + $0x70] sm:$0xff]
    %v76 = vld [vmem:[#allocation2 + $0x78] sm:$0xff]
    %v77 = vld [vmem:[#allocation2 + $0x80] sm:$0xff]
    %v78 = vld [vmem:[#allocation2 + $0x88] sm:$0xff]
    %v79 = vld [vmem:[#allocation2 + $0x90] sm:$0xff]
    %v80 = vld [vmem:[#allocation2 + $0x98] sm:$0xff]
    %v81 = vld [vmem:[#allocation2 + $0xa0] sm:$0xff]
    %v82 = vld [vmem:[#allocation2 + $0xa8] sm:$0xff]
    %v83 = vld [vmem:[#allocation2 + $0xb0] sm:$0xff]
    %v84 = vld [vmem:[#allocation2 + $0xb8] sm:$0xff]
    %v85 = vld [vmem:[#allocation2 + $0xc0] sm:$0xff]
    %v86 = vld [vmem:[#allocation2 + $0xc8] sm:$0xff]
    %v87 = vld [vmem:[#allocation2 + $0xd0] sm:$0xff]
    %v88 = vld [vmem:[#allocation2 + $0xd8] sm:$0xff]
    %v89 = vld [vmem:[#allocation2 + $0xe0] sm:$0xff]
    %v90 = vld [vmem:[#allocation2 + $0xe8] sm:$0xff]
    %v91 = vld [vmem:[#allocation2 + $0xf0] sm:$0xff]
    %v92 = vld [vmem:[#allocation2 + $0xf8] sm:$0xff]
    %v93 = vld [vmem:[#allocation2 + $0x100] sm:$0xff]
    %v94 = vld [vmem:[#allocation2 + $0x108] sm:$0xff]
    %v95 = vld [vmem:[#allocation2 + $0x110] sm:$0xff]
    %v96 = vld [vmem:[#allocation2 + $0x118] sm:$0xff]
    %v97 = vld [vmem:[#allocation2 + $0x120] sm:$0xff]
    %v98 = vld [vmem:[#allocation2 + $0x128] sm:$0xff]
    %v99 = vld [vmem:[#allocation2 + $0x130] sm:$0xff]
    %v100 = vld [vmem:[#allocation2 + $0x138] sm:$0xff]
    %v101 = vld [vmem:[#allocation2 + $0x140] sm:$0xff]
    %v102 = vld [vmem:[#allocation2 + $0x148] sm:$0xff]
    %v103 = vld [vmem:[#allocation2 + $0x150] sm:$0xff]
    %v104 = vld [vmem:[#allocation2 + $0x158] sm:$0xff]
    %v105 = vld [vmem:[#allocation2 + $0x160] sm:$0xff]
    %v106 = vld [vmem:[#allocation2 + $0x168] sm:$0xff]
    %v107 = vld [vmem:[#allocation2 + $0x170] sm:$0xff]
    %v108 = vld [vmem:[#allocation2 + $0x178] sm:$0xff]
    %v109 = vld [vmem:[#allocation2 + $0x180] sm:$0xff]
    %v110 = vld [vmem:[#allocation2 + $0x188] sm:$0xff]
    %v111 = vld [vmem:[#allocation2 + $0x190] sm:$0xff]
    %v112 = vld [vmem:[#allocation2 + $0x198] sm:$0xff]
    %v113 = vld [vmem:[#allocation2 + $0x1a0] sm:$0xff]
    %v114 = vld [vmem:[#allocation2 + $0x1a8] sm:$0xff]
    %v115 = vld [vmem:[#allocation2 + $0x1b0] sm:$0xff]
    %v116 = vld [vmem:[#allocation2 + $0x1b8] sm:$0xff]
    %v117 = vld [vmem:[#allocation2 + $0x1c0] sm:$0xff]
    %v118 = vld [vmem:[#allocation2 + $0x1c8] sm:$0xff]
    %v119 = vld [vmem:[#allocation2 + $0x1d0] sm:$0xff]
    %v120 = vld [vmem:[#allocation2 + $0x1d8] sm:$0xff]
    %v121 = vld [vmem:[#allocation2 + $0x1e0] sm:$0xff]
    %v122 = vld [vmem:[#allocation2 + $0x1e8] sm:$0xff]
    %v123 = vld [vmem:[#allocation2 + $0x1f0] sm:$0xff]
    %v124 = vld [vmem:[#allocation2 + $0x1f8] sm:$0xff]
    %v125 = vld [vmem:[#allocation2 + $0x200] sm:$0xff]
    %v126 = vld [vmem:[#allocation2 + $0x208] sm:$0xff]
    %v127 = vld [vmem:[#allocation2 + $0x210] sm:$0xff]
    %v128 = vld [vmem:[#allocation2 + $0x218] sm:$0xff]
    %v129 = vld [vmem:[#allocation2 + $0x220] sm:$0xff]
    %v130 = vld [vmem:[#allocation2 + $0x228] sm:$0xff]
    %v131 = vld [vmem:[#allocation2 + $0x230] sm:$0xff]
    %v132 = vld [vmem:[#allocation2 + $0x238] sm:$0xff]
    %v133 = vld [vmem:[#allocation2 + $0x240] sm:$0xff]
    %v134 = vld [vmem:[#allocation2 + $0x248] sm:$0xff]
    %v135 = vld [vmem:[#allocation2 + $0x250] sm:$0xff]
    %v136 = vld [vmem:[#allocation2 + $0x258] sm:$0xff]
    %v137 = vld [vmem:[#allocation2 + $0x260] sm:$0xff]
    %v138 = vld [vmem:[#allocation2 + $0x268] sm:$0xff]
    %v139 = vld [vmem:[#allocation2 + $0x270] sm:$0xff]
    %v140 = vld [vmem:[#allocation2 + $0x278] sm:$0xff]
    %v141 = vld [vmem:[#allocation2 + $0x280] sm:$0xff]
    %v142 = vld [vmem:[#allocation2 + $0x288] sm:$0xff]
    %v143 = vld [vmem:[#allocation2 + $0x290] sm:$0xff]
    %v144 = vld [vmem:[#allocation2 + $0x298] sm:$0xff]
    %v145 = vld [vmem:[#allocation2 + $0x2a0] sm:$0xff]
    %v146 = vld [vmem:[#allocation2 + $0x2a8] sm:$0xff]
    %v147 = vld [vmem:[#allocation2 + $0x2b0] sm:$0xff]
    %v148 = vld [vmem:[#allocation2 + $0x2b8] sm:$0xff]
    %v149 = vld [vmem:[#allocation2 + $0x2c0] sm:$0xff]
    %v150 = vld [vmem:[#allocation2 + $0x2c8] sm:$0xff]
    %v151 = vld [vmem:[#allocation2 + $0x2d0] sm:$0xff]
    %v152 = vld [vmem:[#allocation2 + $0x2d8] sm:$0xff]
    %v153 = vld [vmem:[#allocation2 + $0x2e0] sm:$0xff]
    %v154 = vld [vmem:[#allocation2 + $0x2e8] sm:$0xff]
    %v155 = vld [vmem:[#allocation2 + $0x2f0] sm:$0xff]
    %v156 = vld [vmem:[#allocation2 + $0x2f8] sm:$0xff]
    %v157 = vld [vmem:[#allocation2 + $0x300] sm:$0xff]
    %v158 = vld [vmem:[#allocation2 + $0x308] sm:$0xff]
    %v159 = vld [vmem:[#allocation2 + $0x310] sm:$0xff]
    %v160 = vld [vmem:[#allocation2 + $0x318] sm:$0xff]
    %v161 = vld [vmem:[#allocation2 + $0x320] sm:$0xff]
    %v162 = vld [vmem:[#allocation2 + $0x328] sm:$0xff]
    %v163 = vld [vmem:[#allocation2 + $0x330] sm:$0xff]
    %v164 = vld [vmem:[#allocation2 + $0x338] sm:$0xff]
    %v165 = vld [vmem:[#allocation2 + $0x340] sm:$0xff]
    %v166 = vld [vmem:[#allocation2 + $0x348] sm:$0xff]
    %v167 = vld [vmem:[#allocation2 + $0x350] sm:$0xff]
    %v168 = vld [vmem:[#allocation2 + $0x358] sm:$0xff]
    %v169 = vld [vmem:[#allocation2 + $0x360] sm:$0xff]
    %v170 = vld [vmem:[#allocation2 + $0x368] sm:$0xff]
    %v171 = vld [vmem:[#allocation2 + $0x370] sm:$0xff]
    %v172 = vld [vmem:[#allocation2 + $0x378] sm:$0xff]
    %v173 = vld [vmem:[#allocation2 + $0x380] sm:$0xff]
    %v174 = vld [vmem:[#allocation2 + $0x388] sm:$0xff]
    %v175 = vld [vmem:[#allocation2 + $0x390] sm:$0xff]
    %v176 = vld [vmem:[#allocation2 + $0x398] sm:$0xff]
    %v177 = vld [vmem:[#allocation2 + $0x3a0] sm:$0xff]
    %v178 = vld [vmem:[#allocation2 + $0x3a8] sm:$0xff]
    %v179 = vld [vmem:[#allocation2 + $0x3b0] sm:$0xff]
    %v180 = vld [vmem:[#allocation2 + $0x3b8] sm:$0xff]
    %v181 = vld [vmem:[#allocation2 + $0x3c0] sm:$0xff]
    %v182 = vld [vmem:[#allocation2 + $0x3c8] sm:$0xff]
    %v183 = vld [vmem:[#allocation2 + $0x3d0] sm:$0xff]
    %v184 = vld [vmem:[#allocation2 + $0x3d8] sm:$0xff]
    %v185 = vld [vmem:[#allocation2 + $0x3e0] sm:$0xff]
    %v186 = vld [vmem:[#allocation2 + $0x3e8] sm:$0xff]
    %v187 = vld [vmem:[#allocation2 + $0x3f0] sm:$0xff]
    %v188 = vld [vmem:[#allocation2 + $0x3f8] sm:$0xff]
    %v189 = vld [vmem:[#allocation5] sm:$0xff]
    %v190 = vld [vmem:[#allocation5 + $0x8] sm:$0xff]
    %v191 = vld [vmem:[#allocation5 + $0x10] sm:$0xff]
    %v192 = vld [vmem:[#allocation5 + $0x18] sm:$0xff]
    %v193 = vld [vmem:[#allocation5 + $0x20] sm:$0xff]
    %v194 = vld [vmem:[#allocation5 + $0x28] sm:$0xff]
    %v195 = vld [vmem:[#allocation5 + $0x30] sm:$0xff]
    %v196 = vld [vmem:[#allocation5 + $0x38] sm:$0xff]
    %v197 = vld [vmem:[#allocation5 + $0x40] sm:$0xff]
    %v198 = vld [vmem:[#allocation5 + $0x48] sm:$0xff]
    %v199 = vld [vmem:[#allocation5 + $0x50] sm:$0xff]
    %v200 = vld [vmem:[#allocation5 + $0x58] sm:$0xff]
    %v201 = vld [vmem:[#allocation5 + $0x60] sm:$0xff]
    %v202 = vld [vmem:[#allocation5 + $0x68] sm:$0xff]
    %v203 = vld [vmem:[#allocation5 + $0x70] sm:$0xff]
    %v204 = vld [vmem:[#allocation5 + $0x78] sm:$0xff]
    %v205 = vld [vmem:[#allocation5 + $0x80] sm:$0xff]
    %v206 = vld [vmem:[#allocation5 + $0x88] sm:$0xff]
    %v207 = vld [vmem:[#allocation5 + $0x90] sm:$0xff]
    %v208 = vld [vmem:[#allocation5 + $0x98] sm:$0xff]
    %v209 = vld [vmem:[#allocation5 + $0xa0] sm:$0xff]
    %v210 = vld [vmem:[#allocation5 + $0xa8] sm:$0xff]
    %v211 = vld [vmem:[#allocation5 + $0xb0] sm:$0xff]
    %v212 = vld [vmem:[#allocation5 + $0xb8] sm:$0xff]
    %v213 = vld [vmem:[#allocation5 + $0xc0] sm:$0xff]
    %v214 = vld [vmem:[#allocation5 + $0xc8] sm:$0xff]
    %v215 = vld [vmem:[#allocation5 + $0xd0] sm:$0xff]
    %v216 = vld [vmem:[#allocation5 + $0xd8] sm:$0xff]
    %v217 = vld [vmem:[#allocation5 + $0xe0] sm:$0xff]
    %v218 = vld [vmem:[#allocation5 + $0xe8] sm:$0xff]
    %v219 = vld [vmem:[#allocation5 + $0xf0] sm:$0xff]
    %v220 = vld [vmem:[#allocation5 + $0xf8] sm:$0xff]
    %v221 = vld [vmem:[#allocation5 + $0x100] sm:$0xff]
    %v222 = vld [vmem:[#allocation5 + $0x108] sm:$0xff]
    %v223 = vld [vmem:[#allocation5 + $0x110] sm:$0xff]
    %v224 = vld [vmem:[#allocation5 + $0x118] sm:$0xff]
    %v225 = vld [vmem:[#allocation5 + $0x120] sm:$0xff]
    %v226 = vld [vmem:[#allocation5 + $0x128] sm:$0xff]
    %v227 = vld [vmem:[#allocation5 + $0x130] sm:$0xff]
    %v228 = vld [vmem:[#allocation5 + $0x138] sm:$0xff]
    %v229 = vld [vmem:[#allocation5 + $0x140] sm:$0xff]
    %v230 = vld [vmem:[#allocation5 + $0x148] sm:$0xff]
    %v231 = vld [vmem:[#allocation5 + $0x150] sm:$0xff]
    %v232 = vld [vmem:[#allocation5 + $0x158] sm:$0xff]
    %v233 = vld [vmem:[#allocation5 + $0x160] sm:$0xff]
    %v234 = vld [vmem:[#allocation5 + $0x168] sm:$0xff]
    %v235 = vld [vmem:[#allocation5 + $0x170] sm:$0xff]
    %v236 = vld [vmem:[#allocation5 + $0x178] sm:$0xff]
    %v237 = vld [vmem:[#allocation5 + $0x180] sm:$0xff]
    %v238 = vld [vmem:[#allocation5 + $0x188] sm:$0xff]
    %v239 = vld [vmem:[#allocation5 + $0x190] sm:$0xff]
    %v240 = vld [vmem:[#allocation5 + $0x198] sm:$0xff]
    %v241 = vld [vmem:[#allocation5 + $0x1a0] sm:$0xff]
    %v242 = vld [vmem:[#allocation5 + $0x1a8] sm:$0xff]
    %v243 = vld [vmem:[#allocation5 + $0x1b0] sm:$0xff]
    %v244 = vld [vmem:[#allocation5 + $0x1b8] sm:$0xff]
    %v245 = vld [vmem:[#allocation5 + $0x1c0] sm:$0xff]
    %v246 = vld [vmem:[#allocation5 + $0x1c8] sm:$0xff]
    %v247 = vld [vmem:[#allocation5 + $0x1d0] sm:$0xff]
    %v248 = vld [vmem:[#allocation5 + $0x1d8] sm:$0xff]
    %v249 = vld [vmem:[#allocation5 + $0x1e0] sm:$0xff]
    %v250 = vld [vmem:[#allocation5 + $0x1e8] sm:$0xff]
    %v251 = vld [vmem:[#allocation5 + $0x1f0] sm:$0xff]
    %v252 = vld [vmem:[#allocation5 + $0x1f8] sm:$0xff]
    %v253 = vld [vmem:[#allocation5 + $0x200] sm:$0xff]
    %v254 = vld [vmem:[#allocation5 + $0x208] sm:$0xff]
    %v255 = vld [vmem:[#allocation5 + $0x210] sm:$0xff]
    %v256 = vld [vmem:[#allocation5 + $0x218] sm:$0xff]
    %v257 = vld [vmem:[#allocation5 + $0x220] sm:$0xff]
    %v258 = vld [vmem:[#allocation5 + $0x228] sm:$0xff]
    %v259 = vld [vmem:[#allocation5 + $0x230] sm:$0xff]
    %v260 = vld [vmem:[#allocation5 + $0x238] sm:$0xff]
    %v261 = vld [vmem:[#allocation5 + $0x240] sm:$0xff]
    %v262 = vld [vmem:[#allocation5 + $0x248] sm:$0xff]
    %v263 = vld [vmem:[#allocation5 + $0x250] sm:$0xff]
    %v264 = vld [vmem:[#allocation5 + $0x258] sm:$0xff]
    %v265 = vld [vmem:[#allocation5 + $0x260] sm:$0xff]
    %v266 = vld [vmem:[#allocation5 + $0x268] sm:$0xff]
    %v267 = vld [vmem:[#allocation5 + $0x270] sm:$0xff]
    %v268 = vld [vmem:[#allocation5 + $0x278] sm:$0xff]
    %v269 = vld [vmem:[#allocation5 + $0x280] sm:$0xff]
    %v270 = vld [vmem:[#allocation5 + $0x288] sm:$0xff]
    %v271 = vld [vmem:[#allocation5 + $0x290] sm:$0xff]
    %v272 = vld [vmem:[#allocation5 + $0x298] sm:$0xff]
    %v273 = vld [vmem:[#allocation5 + $0x2a0] sm:$0xff]
    %v274 = vld [vmem:[#allocation5 + $0x2a8] sm:$0xff]
    %v275 = vld [vmem:[#allocation5 + $0x2b0] sm:$0xff]
    %v276 = vld [vmem:[#allocation5 + $0x2b8] sm:$0xff]
    %v277 = vld [vmem:[#allocation5 + $0x2c0] sm:$0xff]
    %v278 = vld [vmem:[#allocation5 + $0x2c8] sm:$0xff]
    %v279 = vld [vmem:[#allocation5 + $0x2d0] sm:$0xff]
    %v280 = vld [vmem:[#allocation5 + $0x2d8] sm:$0xff]
    %v281 = vld [vmem:[#allocation5 + $0x2e0] sm:$0xff]
    %v282 = vld [vmem:[#allocation5 + $0x2e8] sm:$0xff]
    %v283 = vld [vmem:[#allocation5 + $0x2f0] sm:$0xff]
    %v284 = vld [vmem:[#allocation5 + $0x2f8] sm:$0xff]
    %v285 = vld [vmem:[#allocation5 + $0x300] sm:$0xff]
    %v286 = vld [vmem:[#allocation5 + $0x308] sm:$0xff]
    %v287 = vld [vmem:[#allocation5 + $0x310] sm:$0xff]
    %v288 = vld [vmem:[#allocation5 + $0x318] sm:$0xff]
    %v289 = vld [vmem:[#allocation5 + $0x320] sm:$0xff]
    %v290 = vld [vmem:[#allocation5 + $0x328] sm:$0xff]
    %v291 = vld [vmem:[#allocation5 + $0x330] sm:$0xff]
    %v292 = vld [vmem:[#allocation5 + $0x338] sm:$0xff]
    %v293 = vld [vmem:[#allocation5 + $0x340] sm:$0xff]
    %v294 = vld [vmem:[#allocation5 + $0x348] sm:$0xff]
    %v295 = vld [vmem:[#allocation5 + $0x350] sm:$0xff]
    %v296 = vld [vmem:[#allocation5 + $0x358] sm:$0xff]
    %v297 = vld [vmem:[#allocation5 + $0x360] sm:$0xff]
    %v298 = vld [vmem:[#allocation5 + $0x368] sm:$0xff]
    %v299 = vld [vmem:[#allocation5 + $0x370] sm:$0xff]
    %v300 = vld [vmem:[#allocation5 + $0x378] sm:$0xff]
    %v301 = vld [vmem:[#allocation5 + $0x380] sm:$0xff]
    %v302 = vld [vmem:[#allocation5 + $0x388] sm:$0xff]
    %v303 = vld [vmem:[#allocation5 + $0x390] sm:$0xff]
    %v304 = vld [vmem:[#allocation5 + $0x398] sm:$0xff]
    %v305 = vld [vmem:[#allocation5 + $0x3a0] sm:$0xff]
    %v306 = vld [vmem:[#allocation5 + $0x3a8] sm:$0xff]
    %v307 = vld [vmem:[#allocation5 + $0x3b0] sm:$0xff]
    %v308 = vld [vmem:[#allocation5 + $0x3b8] sm:$0xff]
    %v309 = vld [vmem:[#allocation5 + $0x3c0] sm:$0xff]
    %v310 = vld [vmem:[#allocation5 + $0x3c8] sm:$0xff]
    %v311 = vld [vmem:[#allocation5 + $0x3d0] sm:$0xff]
    %v312 = vld [vmem:[#allocation5 + $0x3d8] sm:$0xff]
    %v313 = vld [vmem:[#allocation5 + $0x3e0] sm:$0xff]
    %v314 = vld [vmem:[#allocation5 + $0x3e8] sm:$0xff]
    %v315 = vld [vmem:[#allocation5 + $0x3f0] sm:$0xff]
    %v316 = vld [vmem:[#allocation5 + $0x3f8] sm:$0xff]
    %v317 = vsub.f32 %v189, %v61
    %v318 = vsub.f32 %v190, %v62
    %v319 = vsub.f32 %v191, %v63
    %v320 = vsub.f32 %v192, %v64
    %v321 = vsub.f32 %v193, %v65
    %v322 = vsub.f32 %v194, %v66
    %v323 = vsub.f32 %v195, %v67
    %v324 = vsub.f32 %v196, %v68
    %v325 = vsub.f32 %v197, %v69
    %v326 = vsub.f32 %v198, %v70
    %v327 = vsub.f32 %v199, %v71
    %v328 = vsub.f32 %v200, %v72
    %v329 = vsub.f32 %v201, %v73
    %v330 = vsub.f32 %v202, %v74
    %v331 = vsub.f32 %v203, %v75
    %v332 = vsub.f32 %v204, %v76
    %v333 = vsub.f32 %v205, %v77
    %v334 = vsub.f32 %v206, %v78
    %v335 = vsub.f32 %v207, %v79
    %v336 = vsub.f32 %v208, %v80
    %v337 = vsub.f32 %v209, %v81
    %v338 = vsub.f32 %v210, %v82
    %v339 = vsub.f32 %v211, %v83
    %v340 = vsub.f32 %v212, %v84
    %v341 = vsub.f32 %v213, %v85
    %v342 = vsub.f32 %v214, %v86
    %v343 = vsub.f32 %v215, %v87
    %v344 = vsub.f32 %v216, %v88
    %v345 = vsub.f32 %v217, %v89
    %v346 = vsub.f32 %v218, %v90
    %v347 = vsub.f32 %v219, %v91
    %v348 = vsub.f32 %v220, %v92
    %v349 = vsub.f32 %v221, %v93
    %v350 = vsub.f32 %v222, %v94
    %v351 = vsub.f32 %v223, %v95
    %v352 = vsub.f32 %v224, %v96
    %v353 = vsub.f32 %v225, %v97
    %v354 = vsub.f32 %v226, %v98
    %v355 = vsub.f32 %v227, %v99
    %v356 = vsub.f32 %v228, %v100
    %v357 = vsub.f32 %v229, %v101
    %v358 = vsub.f32 %v230, %v102
    %v359 = vsub.f32 %v231, %v103
    %v360 = vsub.f32 %v232, %v104
    %v361 = vsub.f32 %v233, %v105
    %v362 = vsub.f32 %v234, %v106
    %v363 = vsub.f32 %v235, %v107
    %v364 = vsub.f32 %v236, %v108
    %v365 = vsub.f32 %v237, %v109
    %v366 = vsub.f32 %v238, %v110
    %v367 = vsub.f32 %v239, %v111
    %v368 = vsub.f32 %v240, %v112
    %v369 = vsub.f32 %v241, %v113
    %v370 = vsub.f32 %v242, %v114
    %v371 = vsub.f32 %v243, %v115
    %v372 = vsub.f32 %v244, %v116
    %v373 = vsub.f32 %v245, %v117
    %v374 = vsub.f32 %v246, %v118
    %v375 = vsub.f32 %v247, %v119
    %v376 = vsub.f32 %v248, %v120
    %v377 = vsub.f32 %v249, %v121
    %v378 = vsub.f32 %v250, %v122
    %v379 = vsub.f32 %v251, %v123
    %v380 = vsub.f32 %v252, %v124
    %v381 = vsub.f32 %v253, %v125
    %v382 = vsub.f32 %v254, %v126
    %v383 = vsub.f32 %v255, %v127
    %v384 = vsub.f32 %v256, %v128
    %v385 = vsub.f32 %v257, %v129
    %v386 = vsub.f32 %v258, %v130
    %v387 = vsub.f32 %v259, %v131
    %v388 = vsub.f32 %v260, %v132
    %v389 = vsub.f32 %v261, %v133
    %v390 = vsub.f32 %v262, %v134
    %v391 = vsub.f32 %v263, %v135
    %v392 = vsub.f32 %v264, %v136
    %v393 = vsub.f32 %v265, %v137
    %v394 = vsub.f32 %v266, %v138
    %v395 = vsub.f32 %v267, %v139
    %v396 = vsub.f32 %v268, %v140
    %v397 = vsub.f32 %v269, %v141
    %v398 = vsub.f32 %v270, %v142
    %v399 = vsub.f32 %v271, %v143
    %v400 = vsub.f32 %v272, %v144
    %v401 = vsub.f32 %v273, %v145
    %v402 = vsub.f32 %v274, %v146
    %v403 = vsub.f32 %v275, %v147
    %v404 = vsub.f32 %v276, %v148
    %v405 = vsub.f32 %v277, %v149
    %v406 = vsub.f32 %v278, %v150
    %v407 = vsub.f32 %v279, %v151
    %v408 = vsub.f32 %v280, %v152
    %v409 = vsub.f32 %v281, %v153
    %v410 = vsub.f32 %v282, %v154
    %v411 = vsub.f32 %v283, %v155
    %v412 = vsub.f32 %v284, %v156
    %v413 = vsub.f32 %v285, %v157
    %v414 = vsub.f32 %v286, %v158
    %v415 = vsub.f32 %v287, %v159
    %v416 = vsub.f32 %v288, %v160
    %v417 = vsub.f32 %v289, %v161
    %v418 = vsub.f32 %v290, %v162
    %v419 = vsub.f32 %v291, %v163
    %v420 = vsub.f32 %v292, %v164
    %v421 = vsub.f32 %v293, %v165
    %v422 = vsub.f32 %v294, %v166
    %v423 = vsub.f32 %v295, %v167
    %v424 = vsub.f32 %v296, %v168
    %v425 = vsub.f32 %v297, %v169
    %v426 = vsub.f32 %v298, %v170
    %v427 = vsub.f32 %v299, %v171
    %v428 = vsub.f32 %v300, %v172
    %v429 = vsub.f32 %v301, %v173
    %v430 = vsub.f32 %v302, %v174
    %v431 = vsub.f32 %v303, %v175
    %v432 = vsub.f32 %v304, %v176
    %v433 = vsub.f32 %v305, %v177
    %v434 = vsub.f32 %v306, %v178
    %v435 = vsub.f32 %v307, %v179
    %v436 = vsub.f32 %v308, %v180
    %v437 = vsub.f32 %v309, %v181
    %v438 = vsub.f32 %v310, %v182
    %v439 = vsub.f32 %v311, %v183
    %v440 = vsub.f32 %v312, %v184
    %v441 = vsub.f32 %v313, %v185
    %v442 = vsub.f32 %v314, %v186
    %v443 = vsub.f32 %v315, %v187
    %v444 = vsub.f32 %v316, %v188
    %v445 = vpack.c.bf16 %v318, %v317
    %v446 = vpack.c.bf16 %v320, %v319
    %v447 = vpack.c.bf16 %v322, %v321
    %v448 = vpack.c.bf16 %v324, %v323
    %v449 = vpack.c.bf16 %v326, %v325
    %v450 = vpack.c.bf16 %v328, %v327
    %v451 = vpack.c.bf16 %v330, %v329
    %v452 = vpack.c.bf16 %v332, %v331
    %v453 = vpack.c.bf16 %v334, %v333
    %v454 = vpack.c.bf16 %v336, %v335
    %v455 = vpack.c.bf16 %v338, %v337
    %v456 = vpack.c.bf16 %v340, %v339
    %v457 = vpack.c.bf16 %v342, %v341
    %v458 = vpack.c.bf16 %v344, %v343
    %v459 = vpack.c.bf16 %v346, %v345
    %v460 = vpack.c.bf16 %v348, %v347
    %v461 = vpack.c.bf16 %v350, %v349
    %v462 = vpack.c.bf16 %v352, %v351
    %v463 = vpack.c.bf16 %v354, %v353
    %v464 = vpack.c.bf16 %v356, %v355
    %v465 = vpack.c.bf16 %v358, %v357
    %v466 = vpack.c.bf16 %v360, %v359
    %v467 = vpack.c.bf16 %v362, %v361
    %v468 = vpack.c.bf16 %v364, %v363
    %v469 = vpack.c.bf16 %v366, %v365
    %v470 = vpack.c.bf16 %v368, %v367
    %v471 = vpack.c.bf16 %v370, %v369
    %v472 = vpack.c.bf16 %v372, %v371
    %v473 = vpack.c.bf16 %v374, %v373
    %v474 = vpack.c.bf16 %v376, %v375
    %v475 = vpack.c.bf16 %v378, %v377
    %v476 = vpack.c.bf16 %v380, %v379
    %v477 = vpack.c.bf16 %v382, %v381
    %v478 = vpack.c.bf16 %v384, %v383
    %v479 = vpack.c.bf16 %v386, %v385
    %v480 = vpack.c.bf16 %v388, %v387
    %v481 = vpack.c.bf16 %v390, %v389
    %v482 = vpack.c.bf16 %v392, %v391
    %v483 = vpack.c.bf16 %v394, %v393
    %v484 = vpack.c.bf16 %v396, %v395
    %v485 = vpack.c.bf16 %v398, %v397
    %v486 = vpack.c.bf16 %v400, %v399
    %v487 = vpack.c.bf16 %v402, %v401
    %v488 = vpack.c.bf16 %v404, %v403
    %v489 = vpack.c.bf16 %v406, %v405
    %v490 = vpack.c.bf16 %v408, %v407
    %v491 = vpack.c.bf16 %v410, %v409
    %v492 = vpack.c.bf16 %v412, %v411
    %v493 = vpack.c.bf16 %v414, %v413
    %v494 = vpack.c.bf16 %v416, %v415
    %v495 = vpack.c.bf16 %v418, %v417
    %v496 = vpack.c.bf16 %v420, %v419
    %v497 = vpack.c.bf16 %v422, %v421
    %v498 = vpack.c.bf16 %v424, %v423
    %v499 = vpack.c.bf16 %v426, %v425
    %v500 = vpack.c.bf16 %v428, %v427
    %v501 = vpack.c.bf16 %v430, %v429
    %v502 = vpack.c.bf16 %v432, %v431
    %v503 = vpack.c.bf16 %v434, %v433
    %v504 = vpack.c.bf16 %v436, %v435
    %v505 = vpack.c.bf16 %v438, %v437
    %v506 = vpack.c.bf16 %v440, %v439
    %v507 = vpack.c.bf16 %v442, %v441
    %v508 = vpack.c.bf16 %v444, %v443
    %v509 = vld [vmem:[#allocation7] sm:$0xff]
    %v510 = vld [vmem:[#allocation7 + $0x8] sm:$0xff]
    %v511 = vld [vmem:[#allocation7 + $0x10] sm:$0xff]
    %v512 = vld [vmem:[#allocation7 + $0x18] sm:$0xff]
    %v513 = vld [vmem:[#allocation7 + $0x20] sm:$0xff]
    %v514 = vld [vmem:[#allocation7 + $0x28] sm:$0xff]
    %v515 = vld [vmem:[#allocation7 + $0x30] sm:$0xff]
    %v516 = vld [vmem:[#allocation7 + $0x38] sm:$0xff]
    %v517 = vld [vmem:[#allocation7 + $0x40] sm:$0xff]
    %v518 = vld [vmem:[#allocation7 + $0x48] sm:$0xff]
    %v519 = vld [vmem:[#allocation7 + $0x50] sm:$0xff]
    %v520 = vld [vmem:[#allocation7 + $0x58] sm:$0xff]
    %v521 = vld [vmem:[#allocation7 + $0x60] sm:$0xff]
    %v522 = vld [vmem:[#allocation7 + $0x68] sm:$0xff]
    %v523 = vld [vmem:[#allocation7 + $0x70] sm:$0xff]
    %v524 = vld [vmem:[#allocation7 + $0x78] sm:$0xff]
    %525 = vxpose.xlu0.c.b16.start [1/8] %v445, 128
    %526 = vxpose.xlu0.c.b16.cont [2/8] %v446, 128
    %527 = vxpose.xlu0.c.b16.cont [3/8] %v447, 128
    %528 = vxpose.xlu0.c.b16.cont [4/8] %v448, 128
    %529 = vxpose.xlu0.c.b16.cont [5/8] %v449, 128
    %530 = vxpose.xlu0.c.b16.cont [6/8] %v450, 128
    %531 = vxpose.xlu0.c.b16.cont [7/8] %v451, 128
    %532 = vxpose.xlu0.c.b16.end [8/8] %v452, 128
    %v533 = vpop.trf.xlu0
    %v534 = vpop.trf.xlu0
    %v535 = vpop.trf.xlu0
    %v536 = vpop.trf.xlu0
    %v537 = vpop.trf.xlu0
    %v538 = vpop.trf.xlu0
    %v539 = vpop.trf.xlu0
    %v540 = vpop.trf.xlu0
    %541 = vxpose.xlu0.c.b16.start [1/8] %v453, 128
    %542 = vxpose.xlu0.c.b16.cont [2/8] %v454, 128
    %543 = vxpose.xlu0.c.b16.cont [3/8] %v455, 128
    %544 = vxpose.xlu0.c.b16.cont [4/8] %v456, 128
    %545 = vxpose.xlu0.c.b16.cont [5/8] %v457, 128
    %546 = vxpose.xlu0.c.b16.cont [6/8] %v458, 128
    %547 = vxpose.xlu0.c.b16.cont [7/8] %v459, 128
    %548 = vxpose.xlu0.c.b16.end [8/8] %v460, 128
    %v549 = vpop.trf.xlu0
    %v550 = vpop.trf.xlu0
    %v551 = vpop.trf.xlu0
    %v552 = vpop.trf.xlu0
    %v553 = vpop.trf.xlu0
    %v554 = vpop.trf.xlu0
    %v555 = vpop.trf.xlu0
    %v556 = vpop.trf.xlu0
    %557 = vxpose.xlu0.c.b16.start [1/8] %v461, 128
    %558 = vxpose.xlu0.c.b16.cont [2/8] %v462, 128
    %559 = vxpose.xlu0.c.b16.cont [3/8] %v463, 128
    %560 = vxpose.xlu0.c.b16.cont [4/8] %v464, 128
    %561 = vxpose.xlu0.c.b16.cont [5/8] %v465, 128
    %562 = vxpose.xlu0.c.b16.cont [6/8] %v466, 128
    %563 = vxpose.xlu0.c.b16.cont [7/8] %v467, 128
    %564 = vxpose.xlu0.c.b16.end [8/8] %v468, 128
    %v565 = vpop.trf.xlu0
    %v566 = vpop.trf.xlu0
    %v567 = vpop.trf.xlu0
    %v568 = vpop.trf.xlu0
    %v569 = vpop.trf.xlu0
    %v570 = vpop.trf.xlu0
    %v571 = vpop.trf.xlu0
    %v572 = vpop.trf.xlu0
    %573 = vxpose.xlu0.c.b16.start [1/8] %v469, 128
    %574 = vxpose.xlu0.c.b16.cont [2/8] %v470, 128
    %575 = vxpose.xlu0.c.b16.cont [3/8] %v471, 128
    %576 = vxpose.xlu0.c.b16.cont [4/8] %v472, 128
    %577 = vxpose.xlu0.c.b16.cont [5/8] %v473, 128
    %578 = vxpose.xlu0.c.b16.cont [6/8] %v474, 128
    %579 = vxpose.xlu0.c.b16.cont [7/8] %v475, 128
    %580 = vxpose.xlu0.c.b16.end [8/8] %v476, 128
    %v581 = vpop.trf.xlu0
    %v582 = vpop.trf.xlu0
    %v583 = vpop.trf.xlu0
    %v584 = vpop.trf.xlu0
    %v585 = vpop.trf.xlu0
    %v586 = vpop.trf.xlu0
    %v587 = vpop.trf.xlu0
    %v588 = vpop.trf.xlu0
    %589 = vxpose.xlu0.c.b16.start [1/8] %v477, 128
    %590 = vxpose.xlu0.c.b16.cont [2/8] %v478, 128
    %591 = vxpose.xlu0.c.b16.cont [3/8] %v479, 128
    %592 = vxpose.xlu0.c.b16.cont [4/8] %v480, 128
    %593 = vxpose.xlu0.c.b16.cont [5/8] %v481, 128
    %594 = vxpose.xlu0.c.b16.cont [6/8] %v482, 128
    %595 = vxpose.xlu0.c.b16.cont [7/8] %v483, 128
    %596 = vxpose.xlu0.c.b16.end [8/8] %v484, 128
    %v597 = vpop.trf.xlu0
    %v598 = vpop.trf.xlu0
    %v599 = vpop.trf.xlu0
    %v600 = vpop.trf.xlu0
    %v601 = vpop.trf.xlu0
    %v602 = vpop.trf.xlu0
    %v603 = vpop.trf.xlu0
    %v604 = vpop.trf.xlu0
    %605 = vxpose.xlu0.c.b16.start [1/8] %v485, 128
    %606 = vxpose.xlu0.c.b16.cont [2/8] %v486, 128
    %607 = vxpose.xlu0.c.b16.cont [3/8] %v487, 128
    %608 = vxpose.xlu0.c.b16.cont [4/8] %v488, 128
    %609 = vxpose.xlu0.c.b16.cont [5/8] %v489, 128
    %610 = vxpose.xlu0.c.b16.cont [6/8] %v490, 128
    %611 = vxpose.xlu0.c.b16.cont [7/8] %v491, 128
    %612 = vxpose.xlu0.c.b16.end [8/8] %v492, 128
    %v613 = vpop.trf.xlu0
    %v614 = vpop.trf.xlu0
    %v615 = vpop.trf.xlu0
    %v616 = vpop.trf.xlu0
    %v617 = vpop.trf.xlu0
    %v618 = vpop.trf.xlu0
    %v619 = vpop.trf.xlu0
    %v620 = vpop.trf.xlu0
    %621 = vxpose.xlu0.c.b16.start [1/8] %v493, 128
    %622 = vxpose.xlu0.c.b16.cont [2/8] %v494, 128
    %623 = vxpose.xlu0.c.b16.cont [3/8] %v495, 128
    %624 = vxpose.xlu0.c.b16.cont [4/8] %v496, 128
    %625 = vxpose.xlu0.c.b16.cont [5/8] %v497, 128
    %626 = vxpose.xlu0.c.b16.cont [6/8] %v498, 128
    %627 = vxpose.xlu0.c.b16.cont [7/8] %v499, 128
    %628 = vxpose.xlu0.c.b16.end [8/8] %v500, 128
    %v629 = vpop.trf.xlu0
    %v630 = vpop.trf.xlu0
    %v631 = vpop.trf.xlu0
    %v632 = vpop.trf.xlu0
    %v633 = vpop.trf.xlu0
    %v634 = vpop.trf.xlu0
    %v635 = vpop.trf.xlu0
    %v636 = vpop.trf.xlu0
    %637 = vxpose.xlu0.c.b16.start [1/8] %v501, 128
    %638 = vxpose.xlu0.c.b16.cont [2/8] %v502, 128
    %639 = vxpose.xlu0.c.b16.cont [3/8] %v503, 128
    %640 = vxpose.xlu0.c.b16.cont [4/8] %v504, 128
    %641 = vxpose.xlu0.c.b16.cont [5/8] %v505, 128
    %642 = vxpose.xlu0.c.b16.cont [6/8] %v506, 128
    %643 = vxpose.xlu0.c.b16.cont [7/8] %v507, 128
    %644 = vxpose.xlu0.c.b16.end [8/8] %v508, 128
    %v645 = vpop.trf.xlu0
    %v646 = vpop.trf.xlu0
    %v647 = vpop.trf.xlu0
    %v648 = vpop.trf.xlu0
    %v649 = vpop.trf.xlu0
    %v650 = vpop.trf.xlu0
    %v651 = vpop.trf.xlu0
    %v652 = vpop.trf.xlu0
    %653 = vmatprep.subr.bf16.mxu0 0
    %654 = vmatpush1.bf16.msra.mxu0 %v445
    %655 = vmatprep.subr.bf16.mxu0 0
    %656 = vmatpush1.bf16.msra.mxu0 %v446
    %657 = vmatprep.subr.bf16.mxu0 0
    %658 = vmatpush1.bf16.msra.mxu0 %v447
    %659 = vmatprep.subr.bf16.mxu0 0
    %660 = vmatpush1.bf16.msra.mxu0 %v448
    %661 = vmatprep.subr.bf16.mxu0 0
    %662 = vmatpush1.bf16.msra.mxu0 %v449
    %663 = vmatprep.subr.bf16.mxu0 0
    %664 = vmatpush1.bf16.msra.mxu0 %v450
    %665 = vmatprep.subr.bf16.mxu0 0
    %666 = vmatpush1.bf16.msra.mxu0 %v451
    %667 = vmatprep.subr.bf16.mxu0 0
    %668 = vmatpush1.bf16.msra.mxu0 %v452
    %669 = vmatprep.subr.bf16.mxu0 0
    %670 = vmatpush1.bf16.msra.mxu0 %v453
    %671 = vmatprep.subr.bf16.mxu0 0
    %672 = vmatpush1.bf16.msra.mxu0 %v454
    %673 = vmatprep.subr.bf16.mxu0 0
    %674 = vmatpush1.bf16.msra.mxu0 %v455
    %675 = vmatprep.subr.bf16.mxu0 0
    %676 = vmatpush1.bf16.msra.mxu0 %v456
    %677 = vmatprep.subr.bf16.mxu0 0
    %678 = vmatpush1.bf16.msra.mxu0 %v457
    %679 = vmatprep.subr.bf16.mxu0 0
    %680 = vmatpush1.bf16.msra.mxu0 %v458
    %681 = vmatprep.subr.bf16.mxu0 0
    %682 = vmatpush1.bf16.msra.mxu0 %v459
    %683 = vmatprep.subr.bf16.mxu0 0
    %684 = vmatpush1.bf16.msra.mxu0 %v460
    %685 = vmatprep.mubr.bf16.mxu0 %v549
    %686 = vmatmul.mubr.bf16.gmra.mrb[0].mxu0 %v533
    %v687 = vpop.f32.mrb[0].mxu0
    %v688 = vadd.f32 0.0, %v687
    %v689 = vpop.f32.mrb[0].mxu0
    %v690 = vpop.f32.mrb[0].mxu0
    %v691 = vadd.f32 0.0, %v690
    %v692 = vpop.f32.mrb[0].mxu0
    %693 = vmatprep.mubr.bf16.mxu0 %v550
    %694 = vmatmul.mubr.bf16.gmra.mrb[0].mxu0 %v534
    %v695 = vpop.f32.mrb[0].mxu0
    %v696 = vadd.f32 0.0, %v695
    %v697 = vpop.f32.mrb[0].mxu0
    %v698 = vpop.f32.mrb[0].mxu0
    %v699 = vadd.f32 0.0, %v698
    %v700 = vpop.f32.mrb[0].mxu0
    %701 = vmatprep.mubr.bf16.mxu0 %v551
    %702 = vmatmul.mubr.bf16.gmra.mrb[0].mxu0 %v535
    %v703 = vpop.f32.mrb[0].mxu0
    %v704 = vadd.f32 0.0, %v703
    %v705 = vpop.f32.mrb[0].mxu0
    %v706 = vpop.f32.mrb[0].mxu0
    %v707 = vadd.f32 0.0, %v706
    %v708 = vpop.f32.mrb[0].mxu0
    %709 = vmatprep.mubr.bf16.mxu0 %v552
    %710 = vmatmul.mubr.bf16.gmra.mrb[0].mxu0 %v536
    %v711 = vpop.f32.mrb[0].mxu0
    %v712 = vadd.f32 0.0, %v711
    %v713 = vpop.f32.mrb[0].mxu0
    %v714 = vpop.f32.mrb[0].mxu0
    %v715 = vadd.f32 0.0, %v714
    %v716 = vpop.f32.mrb[0].mxu0
    %717 = vmatprep.mubr.bf16.mxu0 %v553
    %718 = vmatmul.mubr.bf16.gmra.mrb[0].mxu0 %v537
    %v719 = vpop.f32.mrb[0].mxu0
    %v720 = vadd.f32 0.0, %v719
    %v721 = vpop.f32.mrb[0].mxu0
    %v722 = vpop.f32.mrb[0].mxu0
    %v723 = vadd.f32 0.0, %v722
    %v724 = vpop.f32.mrb[0].mxu0
    %725 = vmatprep.mubr.bf16.mxu0 %v554
    %726 = vmatmul.mubr.bf16.gmra.mrb[0].mxu0 %v538
    %v727 = vpop.f32.mrb[0].mxu0
    %v728 = vadd.f32 0.0, %v727
    %v729 = vpop.f32.mrb[0].mxu0
    %v730 = vpop.f32.mrb[0].mxu0
    %v731 = vadd.f32 0.0, %v730
    %v732 = vpop.f32.mrb[0].mxu0
    %733 = vmatprep.mubr.bf16.mxu0 %v555
    %734 = vmatmul.mubr.bf16.gmra.mrb[0].mxu0 %v539
    %v735 = vpop.f32.mrb[0].mxu0
    %v736 = vadd.f32 0.0, %v735
    %v737 = vpop.f32.mrb[0].mxu0
    %v738 = vpop.f32.mrb[0].mxu0
    %v739 = vadd.f32 0.0, %v738
    %v740 = vpop.f32.mrb[0].mxu0
    %741 = vmatprep.mubr.bf16.mxu0 %v556
    %742 = vmatmul.mubr.bf16.gmra.mrb[0].mxu0 %v540
    %v743 = vpop.f32.mrb[0].mxu0
    %v744 = vadd.f32 0.0, %v743
    %v745 = vpop.f32.mrb[0].mxu0
    %v746 = vpop.f32.mrb[0].mxu0
    %v747 = vadd.f32 0.0, %v746
    %v748 = vpop.f32.mrb[0].mxu0
    %749 = vdwg.mxu0
    %750 = vmatprep.subr.bf16.mxu0 0
    %751 = vmatpush1.bf16.msra.mxu0 %v461
    %752 = vmatprep.subr.bf16.mxu0 0
    %753 = vmatpush1.bf16.msra.mxu0 %v462
    %754 = vmatprep.subr.bf16.mxu0 0
    %755 = vmatpush1.bf16.msra.mxu0 %v463
    %756 = vmatprep.subr.bf16.mxu0 0
    %757 = vmatpush1.bf16.msra.mxu0 %v464
    %758 = vmatprep.subr.bf16.mxu0 0
    %759 = vmatpush1.bf16.msra.mxu0 %v465
    %760 = vmatprep.subr.bf16.mxu0 0
    %761 = vmatpush1.bf16.msra.mxu0 %v466
    %762 = vmatprep.subr.bf16.mxu0 0
    %763 = vmatpush1.bf16.msra.mxu0 %v467
    %764 = vmatprep.subr.bf16.mxu0 0
    %765 = vmatpush1.bf16.msra.mxu0 %v468
    %766 = vmatprep.subr.bf16.mxu0 0
    %767 = vmatpush1.bf16.msra.mxu0 %v469
    %768 = vmatprep.subr.bf16.mxu0 0
    %769 = vmatpush1.bf16.msra.mxu0 %v470
    %770 = vmatprep.subr.bf16.mxu0 0
    %771 = vmatpush1.bf16.msra.mxu0 %v471
    %772 = vmatprep.subr.bf16.mxu0 0
    %773 = vmatpush1.bf16.msra.mxu0 %v472
    %774 = vmatprep.subr.bf16.mxu0 0
    %775 = vmatpush1.bf16.msra.mxu0 %v473
    %776 = vmatprep.subr.bf16.mxu0 0
    %777 = vmatpush1.bf16.msra.mxu0 %v474
    %778 = vmatprep.subr.bf16.mxu0 0
    %779 = vmatpush1.bf16.msra.mxu0 %v475
    %780 = vmatprep.subr.bf16.mxu0 0
    %781 = vmatpush1.bf16.msra.mxu0 %v476
    %782 = vmatprep.mubr.bf16.mxu0 %v581
    %783 = vmatmul.mubr.bf16.gmra.mrb[0].mxu0 %v565
    %v784 = vpop.f32.mrb[0].mxu0
    %v785 = vadd.f32 %v688, %v784
    %v786 = vpop.f32.mrb[0].mxu0
    %v787 = vpop.f32.mrb[0].mxu0
    %v788 = vadd.f32 %v691, %v787
    %v789 = vpop.f32.mrb[0].mxu0
    %790 = vmatprep.mubr.bf16.mxu0 %v582
    %791 = vmatmul.mubr.bf16.gmra.mrb[0].mxu0 %v566
    %v792 = vpop.f32.mrb[0].mxu0
    %v793 = vadd.f32 %v696, %v792
    %v794 = vpop.f32.mrb[0].mxu0
    %v795 = vpop.f32.mrb[0].mxu0
    %v796 = vadd.f32 %v699, %v795
    %v797 = vpop.f32.mrb[0].mxu0
    %798 = vmatprep.mubr.bf16.mxu0 %v583
    %799 = vmatmul.mubr.bf16.gmra.mrb[0].mxu0 %v567
    %v800 = vpop.f32.mrb[0].mxu0
    %v801 = vadd.f32 %v704, %v800
    %v802 = vpop.f32.mrb[0].mxu0
    %v803 = vpop.f32.mrb[0].mxu0
    %v804 = vadd.f32 %v707, %v803
    %v805 = vpop.f32.mrb[0].mxu0
    %806 = vmatprep.mubr.bf16.mxu0 %v584
    %807 = vmatmul.mubr.bf16.gmra.mrb[0].mxu0 %v568
    %v808 = vpop.f32.mrb[0].mxu0
    %v809 = vadd.f32 %v712, %v808
    %v810 = vpop.f32.mrb[0].mxu0
    %v811 = vpop.f32.mrb[0].mxu0
    %v812 = vadd.f32 %v715, %v811
    %v813 = vpop.f32.mrb[0].mxu0
    %814 = vmatprep.mubr.bf16.mxu0 %v585
    %815 = vmatmul.mubr.bf16.gmra.mrb[0].mxu0 %v569
    %v816 = vpop.f32.mrb[0].mxu0
    %v817 = vadd.f32 %v720, %v816
    %v818 = vpop.f32.mrb[0].mxu0
    %v819 = vpop.f32.mrb[0].mxu0
    %v820 = vadd.f32 %v723, %v819
    %v821 = vpop.f32.mrb[0].mxu0
    %822 = vmatprep.mubr.bf16.mxu0 %v586
    %823 = vmatmul.mubr.bf16.gmra.mrb[0].mxu0 %v570
    %v824 = vpop.f32.mrb[0].mxu0
    %v825 = vadd.f32 %v728, %v824
    %v826 = vpop.f32.mrb[0].mxu0
    %v827 = vpop.f32.mrb[0].mxu0
    %v828 = vadd.f32 %v731, %v827
    %v829 = vpop.f32.mrb[0].mxu0
    %830 = vmatprep.mubr.bf16.mxu0 %v587
    %831 = vmatmul.mubr.bf16.gmra.mrb[0].mxu0 %v571
    %v832 = vpop.f32.mrb[0].mxu0
    %v833 = vadd.f32 %v736, %v832
    %v834 = vpop.f32.mrb[0].mxu0
    %v835 = vpop.f32.mrb[0].mxu0
    %v836 = vadd.f32 %v739, %v835
    %v837 = vpop.f32.mrb[0].mxu0
    %838 = vmatprep.mubr.bf16.mxu0 %v588
    %839 = vmatmul.mubr.bf16.gmra.mrb[0].mxu0 %v572
    %v840 = vpop.f32.mrb[0].mxu0
    %v841 = vadd.f32 %v744, %v840
    %v842 = vpop.f32.mrb[0].mxu0
    %v843 = vpop.f32.mrb[0].mxu0
    %v844 = vadd.f32 %v747, %v843
    %v845 = vpop.f32.mrb[0].mxu0
    %846 = vdwg.mxu0
    %847 = vmatprep.subr.bf16.mxu0 0
    %848 = vmatpush1.bf16.msra.mxu0 %v477
    %849 = vmatprep.subr.bf16.mxu0 0
    %850 = vmatpush1.bf16.msra.mxu0 %v478
    %851 = vmatprep.subr.bf16.mxu0 0
    %852 = vmatpush1.bf16.msra.mxu0 %v479
    %853 = vmatprep.subr.bf16.mxu0 0
    %854 = vmatpush1.bf16.msra.mxu0 %v480
    %855 = vmatprep.subr.bf16.mxu0 0
    %856 = vmatpush1.bf16.msra.mxu0 %v481
    %857 = vmatprep.subr.bf16.mxu0 0
    %858 = vmatpush1.bf16.msra.mxu0 %v482
    %859 = vmatprep.subr.bf16.mxu0 0
    %860 = vmatpush1.bf16.msra.mxu0 %v483
    %861 = vmatprep.subr.bf16.mxu0 0
    %862 = vmatpush1.bf16.msra.mxu0 %v484
    %863 = vmatprep.subr.bf16.mxu0 0
    %864 = vmatpush1.bf16.msra.mxu0 %v485
    %865 = vmatprep.subr.bf16.mxu0 0
    %866 = vmatpush1.bf16.msra.mxu0 %v486
    %867 = vmatprep.subr.bf16.mxu0 0
    %868 = vmatpush1.bf16.msra.mxu0 %v487
    %869 = vmatprep.subr.bf16.mxu0 0
    %870 = vmatpush1.bf16.msra.mxu0 %v488
    %871 = vmatprep.subr.bf16.mxu0 0
    %872 = vmatpush1.bf16.msra.mxu0 %v489
    %873 = vmatprep.subr.bf16.mxu0 0
    %874 = vmatpush1.bf16.msra.mxu0 %v490
    %875 = vmatprep.subr.bf16.mxu0 0
    %876 = vmatpush1.bf16.msra.mxu0 %v491
    %877 = vmatprep.subr.bf16.mxu0 0
    %878 = vmatpush1.bf16.msra.mxu0 %v492
    %879 = vmatprep.mubr.bf16.mxu0 %v613
    %880 = vmatmul.mubr.bf16.gmra.mrb[0].mxu0 %v597
    %v881 = vpop.f32.mrb[0].mxu0
    %v882 = vadd.f32 %v785, %v881
    %v883 = vpop.f32.mrb[0].mxu0
    %v884 = vpop.f32.mrb[0].mxu0
    %v885 = vadd.f32 %v788, %v884
    %v886 = vpop.f32.mrb[0].mxu0
    %887 = vmatprep.mubr.bf16.mxu0 %v614
    %888 = vmatmul.mubr.bf16.gmra.mrb[0].mxu0 %v598
    %v889 = vpop.f32.mrb[0].mxu0
    %v890 = vadd.f32 %v793, %v889
    %v891 = vpop.f32.mrb[0].mxu0
    %v892 = vpop.f32.mrb[0].mxu0
    %v893 = vadd.f32 %v796, %v892
    %v894 = vpop.f32.mrb[0].mxu0
    %895 = vmatprep.mubr.bf16.mxu0 %v615
    %896 = vmatmul.mubr.bf16.gmra.mrb[0].mxu0 %v599
    %v897 = vpop.f32.mrb[0].mxu0
    %v898 = vadd.f32 %v801, %v897
    %v899 = vpop.f32.mrb[0].mxu0
    %v900 = vpop.f32.mrb[0].mxu0
    %v901 = vadd.f32 %v804, %v900
    %v902 = vpop.f32.mrb[0].mxu0
    %903 = vmatprep.mubr.bf16.mxu0 %v616
    %904 = vmatmul.mubr.bf16.gmra.mrb[0].mxu0 %v600
    %v905 = vpop.f32.mrb[0].mxu0
    %v906 = vadd.f32 %v809, %v905
    %v907 = vpop.f32.mrb[0].mxu0
    %v908 = vpop.f32.mrb[0].mxu0
    %v909 = vadd.f32 %v812, %v908
    %v910 = vpop.f32.mrb[0].mxu0
    %911 = vmatprep.mubr.bf16.mxu0 %v617
    %912 = vmatmul.mubr.bf16.gmra.mrb[0].mxu0 %v601
    %v913 = vpop.f32.mrb[0].mxu0
    %v914 = vadd.f32 %v817, %v913
    %v915 = vpop.f32.mrb[0].mxu0
    %v916 = vpop.f32.mrb[0].mxu0
    %v917 = vadd.f32 %v820, %v916
    %v918 = vpop.f32.mrb[0].mxu0
    %919 = vmatprep.mubr.bf16.mxu0 %v618
    %920 = vmatmul.mubr.bf16.gmra.mrb[0].mxu0 %v602
    %v921 = vpop.f32.mrb[0].mxu0
    %v922 = vadd.f32 %v825, %v921
    %v923 = vpop.f32.mrb[0].mxu0
    %v924 = vpop.f32.mrb[0].mxu0
    %v925 = vadd.f32 %v828, %v924
    %v926 = vpop.f32.mrb[0].mxu0
    %927 = vmatprep.mubr.bf16.mxu0 %v619
    %928 = vmatmul.mubr.bf16.gmra.mrb[0].mxu0 %v603
    %v929 = vpop.f32.mrb[0].mxu0
    %v930 = vadd.f32 %v833, %v929
    %v931 = vpop.f32.mrb[0].mxu0
    %v932 = vpop.f32.mrb[0].mxu0
    %v933 = vadd.f32 %v836, %v932
    %v934 = vpop.f32.mrb[0].mxu0
    %935 = vmatprep.mubr.bf16.mxu0 %v620
    %936 = vmatmul.mubr.bf16.gmra.mrb[0].mxu0 %v604
    %v937 = vpop.f32.mrb[0].mxu0
    %v938 = vadd.f32 %v841, %v937
    %v939 = vpop.f32.mrb[0].mxu0
    %v940 = vpop.f32.mrb[0].mxu0
    %v941 = vadd.f32 %v844, %v940
    %v942 = vpop.f32.mrb[0].mxu0
    %943 = vdwg.mxu0
    %944 = vmatprep.subr.bf16.mxu0 0
    %945 = vmatpush1.bf16.msra.mxu0 %v493
    %946 = vmatprep.subr.bf16.mxu0 0
    %947 = vmatpush1.bf16.msra.mxu0 %v494
    %948 = vmatprep.subr.bf16.mxu0 0
    %949 = vmatpush1.bf16.msra.mxu0 %v495
    %950 = vmatprep.subr.bf16.mxu0 0
    %951 = vmatpush1.bf16.msra.mxu0 %v496
    %952 = vmatprep.subr.bf16.mxu0 0
    %953 = vmatpush1.bf16.msra.mxu0 %v497
    %954 = vmatprep.subr.bf16.mxu0 0
    %955 = vmatpush1.bf16.msra.mxu0 %v498
    %956 = vmatprep.subr.bf16.mxu0 0
    %957 = vmatpush1.bf16.msra.mxu0 %v499
    %958 = vmatprep.subr.bf16.mxu0 0
    %959 = vmatpush1.bf16.msra.mxu0 %v500
    %960 = vmatprep.subr.bf16.mxu0 0
    %961 = vmatpush1.bf16.msra.mxu0 %v501
    %962 = vmatprep.subr.bf16.mxu0 0
    %963 = vmatpush1.bf16.msra.mxu0 %v502
    %964 = vmatprep.subr.bf16.mxu0 0
    %965 = vmatpush1.bf16.msra.mxu0 %v503
    %966 = vmatprep.subr.bf16.mxu0 0
    %967 = vmatpush1.bf16.msra.mxu0 %v504
    %968 = vmatprep.subr.bf16.mxu0 0
    %969 = vmatpush1.bf16.msra.mxu0 %v505
    %970 = vmatprep.subr.bf16.mxu0 0
    %971 = vmatpush1.bf16.msra.mxu0 %v506
    %972 = vmatprep.subr.bf16.mxu0 0
    %973 = vmatpush1.bf16.msra.mxu0 %v507
    %974 = vmatprep.subr.bf16.mxu0 0
    %975 = vmatpush1.bf16.msra.mxu0 %v508
    %976 = vmatprep.mubr.bf16.mxu0 %v645
    %977 = vmatmul.mubr.bf16.gmra.mrb[0].mxu0 %v629
    %v978 = vpop.f32.mrb[0].mxu0
    %v979 = vadd.f32 %v882, %v978
    %v980 = vpop.f32.mrb[0].mxu0
    %v981 = vpop.f32.mrb[0].mxu0
    %v982 = vadd.f32 %v885, %v981
    %v983 = vpop.f32.mrb[0].mxu0
    %984 = vmatprep.mubr.bf16.mxu0 %v646
    %985 = vmatmul.mubr.bf16.gmra.mrb[0].mxu0 %v630
    %v986 = vpop.f32.mrb[0].mxu0
    %v987 = vadd.f32 %v890, %v986
    %v988 = vpop.f32.mrb[0].mxu0
    %v989 = vpop.f32.mrb[0].mxu0
    %v990 = vadd.f32 %v893, %v989
    %v991 = vpop.f32.mrb[0].mxu0
    %992 = vmatprep.mubr.bf16.mxu0 %v647
    %993 = vmatmul.mubr.bf16.gmra.mrb[0].mxu0 %v631
    %v994 = vpop.f32.mrb[0].mxu0
    %v995 = vadd.f32 %v898, %v994
    %v996 = vpop.f32.mrb[0].mxu0
    %v997 = vpop.f32.mrb[0].mxu0
    %v998 = vadd.f32 %v901, %v997
    %v999 = vpop.f32.mrb[0].mxu0
    %1000 = vmatprep.mubr.bf16.mxu0 %v648
    %1001 = vmatmul.mubr.bf16.gmra.mrb[0].mxu0 %v632
    %v1002 = vpop.f32.mrb[0].mxu0
    %v1003 = vadd.f32 %v906, %v1002
    %v1004 = vpop.f32.mrb[0].mxu0
    %v1005 = vpop.f32.mrb[0].mxu0
    %v1006 = vadd.f32 %v909, %v1005
    %v1007 = vpop.f32.mrb[0].mxu0
    %1008 = vmatprep.mubr.bf16.mxu0 %v649
    %1009 = vmatmul.mubr.bf16.gmra.mrb[0].mxu0 %v633
    %v1010 = vpop.f32.mrb[0].mxu0
    %v1011 = vadd.f32 %v914, %v1010
    %v1012 = vpop.f32.mrb[0].mxu0
    %v1013 = vpop.f32.mrb[0].mxu0
    %v1014 = vadd.f32 %v917, %v1013
    %v1015 = vpop.f32.mrb[0].mxu0
    %1016 = vmatprep.mubr.bf16.mxu0 %v650
    %1017 = vmatmul.mubr.bf16.gmra.mrb[0].mxu0 %v634
    %v1018 = vpop.f32.mrb[0].mxu0
    %v1019 = vadd.f32 %v922, %v1018
    %v1020 = vpop.f32.mrb[0].mxu0
    %v1021 = vpop.f32.mrb[0].mxu0
    %v1022 = vadd.f32 %v925, %v1021
    %v1023 = vpop.f32.mrb[0].mxu0
    %1024 = vmatprep.mubr.bf16.mxu0 %v651
    %1025 = vmatmul.mubr.bf16.gmra.mrb[0].mxu0 %v635
    %v1026 = vpop.f32.mrb[0].mxu0
    %v1027 = vadd.f32 %v930, %v1026
    %v1028 = vpop.f32.mrb[0].mxu0
    %v1029 = vpop.f32.mrb[0].mxu0
    %v1030 = vadd.f32 %v933, %v1029
    %v1031 = vpop.f32.mrb[0].mxu0
    %1032 = vmatprep.mubr.bf16.mxu0 %v652
    %1033 = vmatmul.mubr.bf16.gmra.mrb[0].mxu0 %v636
    %v1034 = vpop.f32.mrb[0].mxu0
    %v1035 = vadd.f32 %v938, %v1034
    %v1036 = vpop.f32.mrb[0].mxu0
    %v1037 = vpop.f32.mrb[0].mxu0
    %v1038 = vadd.f32 %v941, %v1037
    %v1039 = vpop.f32.mrb[0].mxu0
    %1040 = vdwg.mxu0
    %v1041 = vadd.f32 %v509, %v979
    %v1042 = vadd.f32 %v510, %v982
    %v1043 = vadd.f32 %v511, %v987
    %v1044 = vadd.f32 %v512, %v990
    %v1045 = vadd.f32 %v513, %v995
    %v1046 = vadd.f32 %v514, %v998
    %v1047 = vadd.f32 %v515, %v1003
    %v1048 = vadd.f32 %v516, %v1006
    %v1049 = vadd.f32 %v517, %v1011
    %v1050 = vadd.f32 %v518, %v1014
    %v1051 = vadd.f32 %v519, %v1019
    %v1052 = vadd.f32 %v520, %v1022
    %v1053 = vadd.f32 %v521, %v1027
    %v1054 = vadd.f32 %v522, %v1030
    %v1055 = vadd.f32 %v523, %v1035
    %v1056 = vadd.f32 %v524, %v1038
    %1057 = vst [vmem:[#allocation7] sm:$0xff] %v1041
    %1058 = vst [vmem:[#allocation7 + $0x8] sm:$0xff] %v1042
    %1059 = vst [vmem:[#allocation7 + $0x10] sm:$0xff] %v1043
    %1060 = vst [vmem:[#allocation7 + $0x18] sm:$0xff] %v1044
    %1061 = vst [vmem:[#allocation7 + $0x20] sm:$0xff] %v1045
    %1062 = vst [vmem:[#allocation7 + $0x28] sm:$0xff] %v1046
    %1063 = vst [vmem:[#allocation7 + $0x30] sm:$0xff] %v1047
    %1064 = vst [vmem:[#allocation7 + $0x38] sm:$0xff] %v1048
    %1065 = vst [vmem:[#allocation7 + $0x40] sm:$0xff] %v1049
    %1066 = vst [vmem:[#allocation7 + $0x48] sm:$0xff] %v1050
    %1067 = vst [vmem:[#allocation7 + $0x50] sm:$0xff] %v1051
    %1068 = vst [vmem:[#allocation7 + $0x58] sm:$0xff] %v1052
    %1069 = vst [vmem:[#allocation7 + $0x60] sm:$0xff] %v1053
    %1070 = vst [vmem:[#allocation7 + $0x68] sm:$0xff] %v1054
    %1071 = vst [vmem:[#allocation7 + $0x70] sm:$0xff] %v1055
    %1072 = vst [vmem:[#allocation7 + $0x78] sm:$0xff] %v1056
    // Predicated region
    $region22: #{tpu_custom_call.1} parent=1 // pred_check
      %p1073 = pneg %p41
    $region23: #{tpu_custom_call.1} parent=1 // pred_check_branch
      %1075 = sbr.rel (%p1073) target = $region25
    $region24: #{tpu_custom_call.1} parent=1 // pred_region
      %v1076 = vld [vmem:[#allocation7] sm:$0xff]
      %v1077 = vld [vmem:[#allocation7 + $0x8] sm:$0xff]
      %v1078 = vld [vmem:[#allocation7 + $0x10] sm:$0xff]
      %v1079 = vld [vmem:[#allocation7 + $0x18] sm:$0xff]
      %v1080 = vld [vmem:[#allocation7 + $0x20] sm:$0xff]
      %v1081 = vld [vmem:[#allocation7 + $0x28] sm:$0xff]
      %v1082 = vld [vmem:[#allocation7 + $0x30] sm:$0xff]
      %v1083 = vld [vmem:[#allocation7 + $0x38] sm:$0xff]
      %v1084 = vld [vmem:[#allocation7 + $0x40] sm:$0xff]
      %v1085 = vld [vmem:[#allocation7 + $0x48] sm:$0xff]
      %v1086 = vld [vmem:[#allocation7 + $0x50] sm:$0xff]
      %v1087 = vld [vmem:[#allocation7 + $0x58] sm:$0xff]
      %v1088 = vld [vmem:[#allocation7 + $0x60] sm:$0xff]
      %v1089 = vld [vmem:[#allocation7 + $0x68] sm:$0xff]
      %v1090 = vld [vmem:[#allocation7 + $0x70] sm:$0xff]
      %v1091 = vld [vmem:[#allocation7 + $0x78] sm:$0xff]
      %v1092 = vmul.f32 %v1076, -1.0
      %v1093 = vmul.f32 %v1077, -1.0
      %v1094 = vmul.f32 %v1078, -1.0
      %v1095 = vmul.f32 %v1079, -1.0
      %v1096 = vmul.f32 %v1080, -1.0
      %v1097 = vmul.f32 %v1081, -1.0
      %v1098 = vmul.f32 %v1082, -1.0
      %v1099 = vmul.f32 %v1083, -1.0
      %v1100 = vmul.f32 %v1084, -1.0
      %v1101 = vmul.f32 %v1085, -1.0
      %v1102 = vmul.f32 %v1086, -1.0
      %v1103 = vmul.f32 %v1087, -1.0
      %v1104 = vmul.f32 %v1088, -1.0
      %v1105 = vmul.f32 %v1089, -1.0
      %v1106 = vmul.f32 %v1090, -1.0
      %v1107 = vmul.f32 %v1091, -1.0
      %1108 = vst [vmem:[#allocation7] sm:$0xff] %v1092
      %1109 = vst [vmem:[#allocation7 + $0x8] sm:$0xff] %v1093
      %1110 = vst [vmem:[#allocation7 + $0x10] sm:$0xff] %v1094
      %1111 = vst [vmem:[#allocation7 + $0x18] sm:$0xff] %v1095
      %1112 = vst [vmem:[#allocation7 + $0x20] sm:$0xff] %v1096
      %1113 = vst [vmem:[#allocation7 + $0x28] sm:$0xff] %v1097
      %1114 = vst [vmem:[#allocation7 + $0x30] sm:$0xff] %v1098
      %1115 = vst [vmem:[#allocation7 + $0x38] sm:$0xff] %v1099
      %1116 = vst [vmem:[#allocation7 + $0x40] sm:$0xff] %v1100
      %1117 = vst [vmem:[#allocation7 + $0x48] sm:$0xff] %v1101
      %1118 = vst [vmem:[#allocation7 + $0x50] sm:$0xff] %v1102
      %1119 = vst [vmem:[#allocation7 + $0x58] sm:$0xff] %v1103
      %1120 = vst [vmem:[#allocation7 + $0x60] sm:$0xff] %v1104
      %1121 = vst [vmem:[#allocation7 + $0x68] sm:$0xff] %v1105
      %1122 = vst [vmem:[#allocation7 + $0x70] sm:$0xff] %v1106
      %1123 = vst [vmem:[#allocation7 + $0x78] sm:$0xff] %v1107
    $region25: #{tpu_custom_call.1} parent=1 // pred_fallthru
      _
    // Predicated region
    $region26: #{tpu_custom_call.1} parent=1 // pred_check
      _
    $region27: #{tpu_custom_call.1} parent=1 // pred_check_branch
      %1125 = sbr.rel (0) target = $region29
    $region28: #{tpu_custom_call.1} parent=1 // pred_region
      %s1127 = ssub.s32 2048, 2048
      %1128 = vsyncadd [#allocation4], %s1127
      %s1129 = sshll.u32 [#allocation7], 4
      %s1130 = int_to_ptr.vmem [resolvable:$true] %s1129
      %1135 = dma.vmem_to_hbm [thread:$0]  %s1130, 2048, %s2, [#allocation4], 128, 128, 8
    $region29: #{tpu_custom_call.1} parent=1 // pred_fallthru
      _
    // Predicated region
    $region30: #{tpu_custom_call.1} parent=1 // pred_check
      _
    $region31: #{tpu_custom_call.1} parent=1 // pred_check_branch
      %1137 = sbr.rel (0) target = $region33
    $region32: #{tpu_custom_call.1} parent=1 // pred_region
      %1138 = dma.done [#allocation4], 2048
    $region33: #{tpu_custom_call.1} parent=1 // pred_fallthru
      _
    %1139 = vsyncpa [#allocation3], 1
    %1140 = vsyncpa [#allocation6], 1
    %1141 = vsyncpa [#allocation4], 1

</llo_original>
